<compile_context>
chip_gen: v5e
topology: v5e:2x2
jax: 0.10.0
libtpu: 0.0.40
codegen_flags: <defaults>
</compile_context>

<pallas_src>
import functools

import jax
import jax.numpy as jnp
import numpy as np
from jax.experimental import pallas as pl
from jax.experimental.pallas import tpu as pltpu


def _round_up(x, m):
    return ((x + m - 1) // m) * m


def _mdn_kernel(
    x_ref,
    w1_ref, b1_ref,
    w2_ref, b2_ref,
    w3_ref, b3_ref,
    w4_ref, b4_ref,
    wh_ref, bh_ref,
    out_ref,
    *,
    n_gaussians,
    act_dtype,
):
    G = n_gaussians
    f32 = jnp.float32
    bf16 = jnp.bfloat16

    def dense_tanh(h, w_ref, b_ref):
        # bf16 MXU operands, f32 accumulate, f32 bias add; tanh in act_dtype
        # (bf16 on v6e/v7x EUP, f32 on older gens).
        z = jnp.dot(h.astype(bf16), w_ref[...], preferred_element_type=f32) + b_ref[...]
        return jnp.tanh(z.astype(act_dtype))

    # Trunk: layers 1-4 with tanh.  Layer 5 is folded into the fused head.
    h = dense_tanh(x_ref[...], w1_ref, b1_ref)
    h = dense_tanh(h, w2_ref, b2_ref)
    h = dense_tanh(h, w3_ref, b3_ref)
    h = dense_tanh(h, w4_ref, b4_ref)

    # Single fused, lane-padded head matmul: columns = [pi | mu | sigma | pad].
    head = jnp.dot(h.astype(bf16), wh_ref[...], preferred_element_type=f32) + bh_ref[...]

    # Lane-only masks: (1, P); broadcast over the row dimension by jnp.where.
    P = head.shape[-1]
    col = jax.lax.broadcasted_iota(jnp.int32, (1, P), 1)
    is_pi = col < G
    is_mu = (col >= G) & (col < 2 * G)
    is_sig = (col >= 2 * G) & (col < 3 * G)

    # One EUP exp pass handles both the softmax numerator and exp(sigma).
    m = jnp.max(jnp.where(is_pi, head, -jnp.inf), axis=-1, keepdims=True)
    shifted = jnp.where(is_pi, head - m, jnp.where(is_sig, head, 0.0))
    e = jnp.exp(shifted.astype(act_dtype)).astype(f32)
    denom = jnp.sum(jnp.where(is_pi, e, 0.0), axis=-1, keepdims=True)
    inv = pl.reciprocal(denom, approx=True)
    inv = inv * (2.0 - denom * inv)   # one Newton step -> ~f32-exact 1/denom
    pi = e * inv

    # pi in pi-lanes, raw linear in mu-lanes, exp(linear) in sigma-lanes,
    # (don't-care in pad lanes, sliced off in the wrapper).
    out_ref[...] = jnp.where(is_pi, pi, jnp.where(is_mu, head, e))


def _fuse_head(params):
    """Fold w5/b5 into the three heads (no nonlinearity between them)."""
    w_heads = jnp.concatenate([params["wpi"], params["wmu"], params["wsig"]], axis=1)
    b_heads = jnp.concatenate([params["bpi"], params["bmu"], params["bsig"]], axis=1)
    w_fused = params["w5"] @ w_heads                 # (2H, 3G)
    b_fused = params["b5"] @ w_heads + b_heads       # (1, 3G)
    return w_fused, b_fused


def _tpu_device_kind():
    try:
        return jax.devices()[0].device_kind.lower()
    except Exception:
        return ""


def mdn_forward(x, params, n_gaussians, block_rows=1024):
    """x: (B, n_input) f32.  Weights pre-transposed to (in, out); biases (1, out)."""
    B, n_input = x.shape
    G = n_gaussians

    kind = _tpu_device_kind()
    # bf16 transcendentals only where the EUP is bf16-capable (v6e / v7x).
    act_dtype = jnp.bfloat16 if ("v6" in kind or "v7" in kind) else jnp.float32
    # v7x has 2 TensorCores per chip: keep >= ~4 grid steps so "parallel" shards.
    multi_tc = "v7" in kind

    w_fused, b_fused = _fuse_head(params)

    # Zero-pad head lanes to a full 128-lane multiple for unmasked stores.
    P = _round_up(3 * G, 128)
    w_fused = jnp.pad(w_fused, ((0, 0), (0, P - 3 * G)))
    b_fused = jnp.pad(b_fused, ((0, 0), (0, P - 3 * G)))

    # Batch tiling (multiple of 8 sublanes); pad B so the grid divides evenly.
    TM = min(block_rows, _round_up(B, 8))
    if multi_tc:
        TM = min(TM, max(8, _round_up((B + 3) // 4, 8)))
    B_pad = _round_up(B, TM)
    if B_pad != B:
        x = jnp.pad(x, ((0, B_pad - B), (0, 0)))

    bf16 = jnp.bfloat16
    weights = (
        params["w1"].astype(bf16), params["b1"],
        params["w2"].astype(bf16), params["b2"],
        params["w3"].astype(bf16), params["b3"],
        params["w4"].astype(bf16), params["b4"],
        w_fused.astype(bf16), b_fused,
    )

    x_spec = pl.BlockSpec((TM, n_input), lambda i: (i, 0))
    w_specs = [pl.BlockSpec(w.shape, lambda i: (0, 0)) for w in weights]
    out_spec = pl.BlockSpec((TM, P), lambda i: (i, 0))

    out = pl.pallas_call(
        functools.partial(_mdn_kernel, n_gaussians=G, act_dtype=act_dtype),
        out_shape=jax.ShapeDtypeStruct((B_pad, P), jnp.float32),
        grid_spec=pltpu.PrefetchScalarGridSpec(
            num_scalar_prefetch=0,
            grid=(B_pad // TM,),
            in_specs=[x_spec] + w_specs,
            out_specs=out_spec,
        ),
        compiler_params=pltpu.CompilerParams(
            dimension_semantics=("parallel",),
            vmem_limit_bytes=32 * 1024 * 1024,
        ),
    )(x, *weights)

    out = out[:B]
    pi = out[:, :G]
    mu = out[:, G:2 * G]
    sigma = out[:, 2 * G:3 * G]
    return pi, mu, sigma


def init_params(key, n_input, n_hidden, n_gaussians):
    """Deterministic init matching torch.nn.Linear default (U[-1/sqrt(in), 1/sqrt(in)]).
    Weights stored pre-transposed as (in, out); biases as (1, out)."""
    dims = [
        (n_input, n_hidden),           # w1
        (n_hidden, 2 * n_hidden),      # w2
        (2 * n_hidden, 4 * n_hidden),  # w3
        (4 * n_hidden, 2 * n_hidden),  # w4
        (2 * n_hidden, n_hidden),      # w5
        (n_hidden, n_gaussians),       # wpi
        (n_hidden, n_gaussians),       # wsig
        (n_hidden, n_gaussians),       # wmu
    ]
    names = ["1", "2", "3", "4", "5", "pi", "sig", "mu"]
    params = {}
    for name, (fan_in, fan_out) in zip(names, dims):
        key, kw, kb = jax.random.split(key, 3)
        bound = 1.0 / np.sqrt(fan_in)
        params["w" + name] = jax.random.uniform(
            kw, (fan_in, fan_out), jnp.float32, -bound, bound)
        params["b" + name] = jax.random.uniform(
            kb, (1, fan_out), jnp.float32, -bound, bound)
    return params


def mdn_reference(x, p):
    """Pure-JAX f32 reference (unfused, exact divide) matching the PyTorch module."""
    h = jnp.tanh(x @ p["w1"] + p["b1"])
    h = jnp.tanh(h @ p["w2"] + p["b2"])
    h = jnp.tanh(h @ p["w3"] + p["b3"])
    h = jnp.tanh(h @ p["w4"] + p["b4"])
    h = h @ p["w5"] + p["b5"]
    pi = jax.nn.softmax(h @ p["wpi"] + p["bpi"], axis=-1)
    sigma = jnp.exp(h @ p["wsig"] + p["bsig"])
    mu = h @ p["wmu"] + p["bmu"]
    return pi, mu, sigma


if __name__ == "__main__":
    key = jax.random.PRNGKey(0)
    n_input, n_hidden, n_gaussians = 4, 32, 5
    batch = 8

    key, kx = jax.random.split(key)
    x = jax.random.normal(kx, (batch, n_input), jnp.float32)
    params = init_params(key, n_input, n_hidden, n_gaussians)

    pi, mu, sigma = mdn_forward(x, params, n_gaussians)
    jax.block_until_ready((pi, mu, sigma))

    pi_r, mu_r, sigma_r = mdn_reference(x, params)
    # Tolerances cover bf16 MXU operands (plus bf16 tanh/exp on v6e/v7x) and the
    # w5->head fold; typical observed deviation is ~5e-3 on O(1) values.
    np.testing.assert_allclose(np.asarray(pi), np.asarray(pi_r), rtol=0.0, atol=3e-2)
    np.testing.assert_allclose(np.asarray(mu), np.asarray(mu_r), rtol=0.0, atol=5e-2)
    np.testing.assert_allclose(np.asarray(sigma), np.asarray(sigma_r), rtol=5e-2, atol=2e-2)
    # Mixture weights stay normalized thanks to the Newton-refined reciprocal.
    np.testing.assert_allclose(np.asarray(pi).sum(-1), 1.0, rtol=0.0, atol=1e-3)

    print("KERNEL_OK")
</pallas_src>

<mosaic_0001>
module attributes {stable_mosaic.version = 11 : i64} {
  func.func @_mdn_kernel(%arg0: i32, %arg1: memref<8x4xf32, #tpu.memory_space<vmem>>, %arg2: memref<4x32xbf16, #tpu.memory_space<vmem>>, %arg3: memref<1x32xf32, #tpu.memory_space<vmem>>, %arg4: memref<32x64xbf16, #tpu.memory_space<vmem>>, %arg5: memref<1x64xf32, #tpu.memory_space<vmem>>, %arg6: memref<64x128xbf16, #tpu.memory_space<vmem>>, %arg7: memref<1x128xf32, #tpu.memory_space<vmem>>, %arg8: memref<128x64xbf16, #tpu.memory_space<vmem>>, %arg9: memref<1x64xf32, #tpu.memory_space<vmem>>, %arg10: memref<64x128xbf16, #tpu.memory_space<vmem>>, %arg11: memref<1x128xf32, #tpu.memory_space<vmem>>, %arg12: memref<8x128xf32, #tpu.memory_space<vmem>>) attributes {dimension_semantics = [#tpu.dimension_semantics<parallel>], iteration_bounds = array<i64: 1>, scalar_prefetch = 0 : i64, scratch_operands = 0 : i64, tpu.core_type = #tpu.core_type<tc>, window_params = [{transform_indices = @transform_0, window_bounds = array<i64: 8, 4>}, {pipeline_mode = #tpu.pipeline_mode<synchronous>, transform_indices = @transform_1, window_bounds = array<i64: 4, 32>}, {pipeline_mode = #tpu.pipeline_mode<synchronous>, transform_indices = @transform_2, window_bounds = array<i64: 1, 32>}, {pipeline_mode = #tpu.pipeline_mode<synchronous>, transform_indices = @transform_3, window_bounds = array<i64: 32, 64>}, {pipeline_mode = #tpu.pipeline_mode<synchronous>, transform_indices = @transform_4, window_bounds = array<i64: 1, 64>}, {pipeline_mode = #tpu.pipeline_mode<synchronous>, transform_indices = @transform_5, window_bounds = array<i64: 64, 128>}, {pipeline_mode = #tpu.pipeline_mode<synchronous>, transform_indices = @transform_6, window_bounds = array<i64: 1, 128>}, {pipeline_mode = #tpu.pipeline_mode<synchronous>, transform_indices = @transform_7, window_bounds = array<i64: 128, 64>}, {pipeline_mode = #tpu.pipeline_mode<synchronous>, transform_indices = @transform_8, window_bounds = array<i64: 1, 64>}, {pipeline_mode = #tpu.pipeline_mode<synchronous>, transform_indices = @transform_9, window_bounds = array<i64: 64, 128>}, {pipeline_mode = #tpu.pipeline_mode<synchronous>, transform_indices = @transform_10, window_bounds = array<i64: 1, 128>}, {transform_indices = @transform_11, window_bounds = array<i64: 8, 128>}]} {
    %c0 = arith.constant 0 : index
    %c0_0 = arith.constant 0 : index
    %0 = vector.load %arg1[%c0, %c0_0] : memref<8x4xf32, #tpu.memory_space<vmem>>, vector<8x4xf32>
    %1 = arith.truncf %0 : vector<8x4xf32> to vector<8x4xbf16>
    %c0_1 = arith.constant 0 : index
    %c0_2 = arith.constant 0 : index
    %2 = vector.load %arg2[%c0_1, %c0_2] : memref<4x32xbf16, #tpu.memory_space<vmem>>, vector<4x32xbf16>
    %cst = arith.constant dense<0.000000e+00> : vector<8x32xf32>
    %3 = tpu.matmul %1, %2, %cst {dimension_numbers = #tpu.dot_dimension_numbers<[1], [0], [0], [1], [0, 0, 1, 1], [], []>} : vector<8x4xbf16>, vector<4x32xbf16>, vector<8x32xf32> -> vector<8x32xf32>
    %c0_3 = arith.constant 0 : index
    %c0_4 = arith.constant 0 : index
    %4 = vector.load %arg3[%c0_3, %c0_4] : memref<1x32xf32, #tpu.memory_space<vmem>>, vector<1x32xf32>
    %5 = vector.broadcast %4 : vector<1x32xf32> to vector<8x32xf32>
    %6 = arith.addf %3, %5 : vector<8x32xf32>
    %7 = math.tanh %6 : vector<8x32xf32>
    %8 = arith.truncf %7 : vector<8x32xf32> to vector<8x32xbf16>
    %c0_5 = arith.constant 0 : index
    %c0_6 = arith.constant 0 : index
    %9 = vector.load %arg4[%c0_5, %c0_6] : memref<32x64xbf16, #tpu.memory_space<vmem>>, vector<32x64xbf16>
    %cst_7 = arith.constant dense<0.000000e+00> : vector<8x64xf32>
    %10 = tpu.matmul %8, %9, %cst_7 {dimension_numbers = #tpu.dot_dimension_numbers<[1], [0], [0], [1], [0, 0, 1, 1], [], []>} : vector<8x32xbf16>, vector<32x64xbf16>, vector<8x64xf32> -> vector<8x64xf32>
    %c0_8 = arith.constant 0 : index
    %c0_9 = arith.constant 0 : index
    %11 = vector.load %arg5[%c0_8, %c0_9] : memref<1x64xf32, #tpu.memory_space<vmem>>, vector<1x64xf32>
    %12 = vector.broadcast %11 : vector<1x64xf32> to vector<8x64xf32>
    %13 = arith.addf %10, %12 : vector<8x64xf32>
    %14 = math.tanh %13 : vector<8x64xf32>
    %15 = arith.truncf %14 : vector<8x64xf32> to vector<8x64xbf16>
    %c0_10 = arith.constant 0 : index
    %c0_11 = arith.constant 0 : index
    %16 = vector.load %arg6[%c0_10, %c0_11] : memref<64x128xbf16, #tpu.memory_space<vmem>>, vector<64x128xbf16>
    %cst_12 = arith.constant dense<0.000000e+00> : vector<8x128xf32>
    %17 = tpu.matmul %15, %16, %cst_12 {dimension_numbers = #tpu.dot_dimension_numbers<[1], [0], [0], [1], [0, 0, 1, 1], [], []>} : vector<8x64xbf16>, vector<64x128xbf16>, vector<8x128xf32> -> vector<8x128xf32>
    %c0_13 = arith.constant 0 : index
    %c0_14 = arith.constant 0 : index
    %18 = vector.load %arg7[%c0_13, %c0_14] : memref<1x128xf32, #tpu.memory_space<vmem>>, vector<1x128xf32>
    %19 = vector.broadcast %18 : vector<1x128xf32> to vector<8x128xf32>
    %20 = arith.addf %17, %19 : vector<8x128xf32>
    %21 = math.tanh %20 : vector<8x128xf32>
    %22 = arith.truncf %21 : vector<8x128xf32> to vector<8x128xbf16>
    %c0_15 = arith.constant 0 : index
    %c0_16 = arith.constant 0 : index
    %23 = vector.load %arg8[%c0_15, %c0_16] : memref<128x64xbf16, #tpu.memory_space<vmem>>, vector<128x64xbf16>
    %cst_17 = arith.constant dense<0.000000e+00> : vector<8x64xf32>
    %24 = tpu.matmul %22, %23, %cst_17 {dimension_numbers = #tpu.dot_dimension_numbers<[1], [0], [0], [1], [0, 0, 1, 1], [], []>} : vector<8x128xbf16>, vector<128x64xbf16>, vector<8x64xf32> -> vector<8x64xf32>
    %c0_18 = arith.constant 0 : index
    %c0_19 = arith.constant 0 : index
    %25 = vector.load %arg9[%c0_18, %c0_19] : memref<1x64xf32, #tpu.memory_space<vmem>>, vector<1x64xf32>
    %26 = vector.broadcast %25 : vector<1x64xf32> to vector<8x64xf32>
    %27 = arith.addf %24, %26 : vector<8x64xf32>
    %28 = math.tanh %27 : vector<8x64xf32>
    %29 = arith.truncf %28 : vector<8x64xf32> to vector<8x64xbf16>
    %c0_20 = arith.constant 0 : index
    %c0_21 = arith.constant 0 : index
    %30 = vector.load %arg10[%c0_20, %c0_21] : memref<64x128xbf16, #tpu.memory_space<vmem>>, vector<64x128xbf16>
    %cst_22 = arith.constant dense<0.000000e+00> : vector<8x128xf32>
    %31 = tpu.matmul %29, %30, %cst_22 {dimension_numbers = #tpu.dot_dimension_numbers<[1], [0], [0], [1], [0, 0, 1, 1], [], []>} : vector<8x64xbf16>, vector<64x128xbf16>, vector<8x128xf32> -> vector<8x128xf32>
    %c0_23 = arith.constant 0 : index
    %c0_24 = arith.constant 0 : index
    %32 = vector.load %arg11[%c0_23, %c0_24] : memref<1x128xf32, #tpu.memory_space<vmem>>, vector<1x128xf32>
    %33 = vector.broadcast %32 : vector<1x128xf32> to vector<8x128xf32>
    %34 = arith.addf %31, %33 : vector<8x128xf32>
    %35 = tpu.iota {dimensions = array<i32: 1>} : vector<1x128xi32>
    %c5_i32 = arith.constant 5 : i32
    %36 = vector.broadcast %c5_i32 : i32 to vector<1x128xi32>
    %37 = arith.cmpi slt, %35, %36 : vector<1x128xi32>
    %c5_i32_25 = arith.constant 5 : i32
    %38 = vector.broadcast %c5_i32_25 : i32 to vector<1x128xi32>
    %39 = arith.cmpi sge, %35, %38 : vector<1x128xi32>
    %c10_i32 = arith.constant 10 : i32
    %40 = vector.broadcast %c10_i32 : i32 to vector<1x128xi32>
    %41 = arith.cmpi slt, %35, %40 : vector<1x128xi32>
    %42 = arith.andi %39, %41 : vector<1x128xi1>
    %c10_i32_26 = arith.constant 10 : i32
    %43 = vector.broadcast %c10_i32_26 : i32 to vector<1x128xi32>
    %44 = arith.cmpi sge, %35, %43 : vector<1x128xi32>
    %c15_i32 = arith.constant 15 : i32
    %45 = vector.broadcast %c15_i32 : i32 to vector<1x128xi32>
    %46 = arith.cmpi slt, %35, %45 : vector<1x128xi32>
    %47 = arith.andi %44, %46 : vector<1x128xi1>
    %cst_27 = arith.constant 0xFF800000 : f32
    %48 = vector.shape_cast %37 : vector<1x128xi1> to vector<1x128xi1>
    %49 = vector.broadcast %48 : vector<1x128xi1> to vector<8x128xi1>
    %50 = vector.broadcast %cst_27 : f32 to vector<8x128xf32>
    %51 = arith.select %49, %34, %50 : vector<8x128xi1>, vector<8x128xf32>
    %cst_28 = arith.constant dense<0xFF800000> : vector<8xf32>
    %52 = vector.multi_reduction <maximumf>, %51, %cst_28 [1] : vector<8x128xf32> to vector<8xf32>
    %53 = vector.shape_cast %52 : vector<8xf32> to vector<8x1xf32>
    %54 = vector.broadcast %53 : vector<8x1xf32> to vector<8x128xf32>
    %55 = arith.subf %34, %54 : vector<8x128xf32>
    %cst_29 = arith.constant 0.000000e+00 : f32
    %56 = vector.shape_cast %47 : vector<1x128xi1> to vector<1x128xi1>
    %57 = vector.broadcast %56 : vector<1x128xi1> to vector<8x128xi1>
    %58 = vector.broadcast %cst_29 : f32 to vector<8x128xf32>
    %59 = arith.select %57, %34, %58 : vector<8x128xi1>, vector<8x128xf32>
    %60 = vector.shape_cast %37 : vector<1x128xi1> to vector<1x128xi1>
    %61 = vector.broadcast %60 : vector<1x128xi1> to vector<8x128xi1>
    %62 = arith.select %61, %55, %59 : vector<8x128xi1>, vector<8x128xf32>
    %63 = math.exp %62 : vector<8x128xf32>
    %cst_30 = arith.constant 0.000000e+00 : f32
    %64 = vector.shape_cast %37 : vector<1x128xi1> to vector<1x128xi1>
    %65 = vector.broadcast %64 : vector<1x128xi1> to vector<8x128xi1>
    %66 = vector.broadcast %cst_30 : f32 to vector<8x128xf32>
    %67 = arith.select %65, %63, %66 : vector<8x128xi1>, vector<8x128xf32>
    %cst_31 = arith.constant dense<0.000000e+00> : vector<8xf32>
    %68 = vector.multi_reduction <add>, %67, %cst_31 [1] : vector<8x128xf32> to vector<8xf32>
    %69 = vector.shape_cast %68 : vector<8xf32> to vector<8x1xf32>
    %70 = tpu.reciprocal %69 {approx = true} : vector<8x1xf32> -> vector<8x1xf32>
    %71 = arith.mulf %69, %70 : vector<8x1xf32>
    %cst_32 = arith.constant 2.000000e+00 : f32
    %72 = vector.broadcast %cst_32 : f32 to vector<8x1xf32>
    %73 = arith.subf %72, %71 : vector<8x1xf32>
    %74 = arith.mulf %70, %73 : vector<8x1xf32>
    %75 = vector.broadcast %74 : vector<8x1xf32> to vector<8x128xf32>
    %76 = arith.mulf %63, %75 : vector<8x128xf32>
    %77 = vector.shape_cast %42 : vector<1x128xi1> to vector<1x128xi1>
    %78 = vector.broadcast %77 : vector<1x128xi1> to vector<8x128xi1>
    %79 = arith.select %78, %34, %63 : vector<8x128xi1>, vector<8x128xf32>
    %80 = vector.shape_cast %37 : vector<1x128xi1> to vector<1x128xi1>
    %81 = vector.broadcast %80 : vector<1x128xi1> to vector<8x128xi1>
    %82 = arith.select %81, %76, %79 : vector<8x128xi1>, vector<8x128xf32>
    %c0_33 = arith.constant 0 : index
    %c0_34 = arith.constant 0 : index
    %83 = vector.load %arg12[%c0_33, %c0_34] : memref<8x128xf32, #tpu.memory_space<vmem>>, vector<8x128xf32>
    tpu.vector_store %arg12[%c0_33, %c0_34], %82 {strides = array<i32>} : memref<8x128xf32, #tpu.memory_space<vmem>>, vector<8x128xf32>,
    return
  }
  func.func @transform_0(%arg0: i32) -> (i32, i32) {
    %c0_i32 = arith.constant 0 : i32
    %c0_i32_0 = arith.constant 0 : i32
    return %arg0, %c0_i32 : i32, i32
  }
  func.func @transform_1(%arg0: i32) -> (i32, i32) {
    %c0_i32 = arith.constant 0 : i32
    %c0_i32_0 = arith.constant 0 : i32
    %c0_i32_1 = arith.constant 0 : i32
    return %c0_i32, %c0_i32_0 : i32, i32
  }
  func.func @transform_2(%arg0: i32) -> (i32, i32) {
    %c0_i32 = arith.constant 0 : i32
    %c0_i32_0 = arith.constant 0 : i32
    %c0_i32_1 = arith.constant 0 : i32
    return %c0_i32, %c0_i32_0 : i32, i32
  }
  func.func @transform_3(%arg0: i32) -> (i32, i32) {
    %c0_i32 = arith.constant 0 : i32
    %c0_i32_0 = arith.constant 0 : i32
    %c0_i32_1 = arith.constant 0 : i32
    return %c0_i32, %c0_i32_0 : i32, i32
  }
  func.func @transform_4(%arg0: i32) -> (i32, i32) {
    %c0_i32 = arith.constant 0 : i32
    %c0_i32_0 = arith.constant 0 : i32
    %c0_i32_1 = arith.constant 0 : i32
    return %c0_i32, %c0_i32_0 : i32, i32
  }
  func.func @transform_5(%arg0: i32) -> (i32, i32) {
    %c0_i32 = arith.constant 0 : i32
    %c0_i32_0 = arith.constant 0 : i32
    %c0_i32_1 = arith.constant 0 : i32
    return %c0_i32, %c0_i32_0 : i32, i32
  }
  func.func @transform_6(%arg0: i32) -> (i32, i32) {
    %c0_i32 = arith.constant 0 : i32
    %c0_i32_0 = arith.constant 0 : i32
    %c0_i32_1 = arith.constant 0 : i32
    return %c0_i32, %c0_i32_0 : i32, i32
  }
  func.func @transform_7(%arg0: i32) -> (i32, i32) {
    %c0_i32 = arith.constant 0 : i32
    %c0_i32_0 = arith.constant 0 : i32
    %c0_i32_1 = arith.constant 0 : i32
    return %c0_i32, %c0_i32_0 : i32, i32
  }
  func.func @transform_8(%arg0: i32) -> (i32, i32) {
    %c0_i32 = arith.constant 0 : i32
    %c0_i32_0 = arith.constant 0 : i32
    %c0_i32_1 = arith.constant 0 : i32
    return %c0_i32, %c0_i32_0 : i32, i32
  }
  func.func @transform_9(%arg0: i32) -> (i32, i32) {
    %c0_i32 = arith.constant 0 : i32
    %c0_i32_0 = arith.constant 0 : i32
    %c0_i32_1 = arith.constant 0 : i32
    return %c0_i32, %c0_i32_0 : i32, i32
  }
  func.func @transform_10(%arg0: i32) -> (i32, i32) {
    %c0_i32 = arith.constant 0 : i32
    %c0_i32_0 = arith.constant 0 : i32
    %c0_i32_1 = arith.constant 0 : i32
    return %c0_i32, %c0_i32_0 : i32, i32
  }
  func.func @transform_11(%arg0: i32) -> (i32, i32) {
    %c0_i32 = arith.constant 0 : i32
    %c0_i32_0 = arith.constant 0 : i32
    return %arg0, %c0_i32 : i32, i32
  }
}

</mosaic_0001>

<llo_original>
// kernel: tpu_custom_call.1
$region0: #{tpu_custom_call.1}
  #allocation0 [shape = 'u32[]', space=smem, size = 0x4, offset = 0x4, fixed_abs, tag = 'smem constant byte address 0x4 - core index']
  #allocation1 [shape = 'u32[72,128]{1,0:T(1,128)}', space=vmem, size = 0x9000, scoped, tag = 'internal scratch']
  %s0 = inlined_call_operand.vmem [shape: f32[8,4], index: 0, kind: input, shape index: {}]
  %s1 = inlined_call_operand.vmem [shape: bf16[4,32], index: 1, kind: input, shape index: {}]
  %s2 = inlined_call_operand.vmem [shape: f32[1,32], index: 2, kind: input, shape index: {}]
  %s3 = inlined_call_operand.vmem [shape: bf16[32,64], index: 3, kind: input, shape index: {}]
  %s4 = inlined_call_operand.vmem [shape: f32[1,64], index: 4, kind: input, shape index: {}]
  %s5 = inlined_call_operand.vmem [shape: bf16[64,128], index: 5, kind: input, shape index: {}]
  %s6 = inlined_call_operand.vmem [shape: f32[1,128], index: 6, kind: input, shape index: {}]
  %s7 = inlined_call_operand.vmem [shape: bf16[128,64], index: 7, kind: input, shape index: {}]
  %s8 = inlined_call_operand.vmem [shape: f32[1,64], index: 8, kind: input, shape index: {}]
  %s9 = inlined_call_operand.vmem [shape: bf16[64,128], index: 9, kind: input, shape index: {}]
  %s10 = inlined_call_operand.vmem [shape: f32[1,128], index: 10, kind: input, shape index: {}]
  %s11 = inlined_call_operand.hbm [shape: f32[8,128], index: 11, kind: output, shape index: {}]
  %s12 = sld [smem:[#allocation0]]
  $region54: #{tpu_custom_call.1} parent=0
    _
  %s14 = ssub.s32 1, %s12
  %s15 = scalar_select 0, %s14, %s12
  $region1: #{tpu_custom_call.1} parent=0
    #allocation2 [shape = 'u8[4096]{0}', space=vmem, size = 0x1000, scoped, tag = 'output window, operand 0, single buffered']
    #allocation3 [shape = 's32[1]{0}', space=sflag, size = 0x4, scoped, tag = 'scoped memory for tpu_custom_call.1']
    %16 = vsyncpa [#allocation3], 0
    // Predicated region
    $region2: #{tpu_custom_call.1} parent=1 // pred_check
      _
    $region3: #{tpu_custom_call.1} parent=1 // pred_check_branch
      %18 = sbr.rel (0) target = $region5
    $region4: #{tpu_custom_call.1} parent=1 // pred_region
      _
    $region5: #{tpu_custom_call.1} parent=1 // pred_fallthru
      _
    // Predicated region
    $region6: #{tpu_custom_call.1} parent=1 // pred_check
      _
    $region7: #{tpu_custom_call.1} parent=1 // pred_check_branch
      %20 = sbr.rel (0) target = $region9
    $region8: #{tpu_custom_call.1} parent=1 // pred_region
      _
    $region9: #{tpu_custom_call.1} parent=1 // pred_fallthru
      _
    // Predicated region
    $region10: #{tpu_custom_call.1} parent=1 // pred_check
      _
    $region11: #{tpu_custom_call.1} parent=1 // pred_check_branch
      %22 = sbr.rel (0) target = $region13
    $region12: #{tpu_custom_call.1} parent=1 // pred_region
      _
    $region13: #{tpu_custom_call.1} parent=1 // pred_fallthru
      _
    // Predicated region
    $region14: #{tpu_custom_call.1} parent=1 // pred_check
      _
    $region15: #{tpu_custom_call.1} parent=1 // pred_check_branch
      %24 = sbr.rel (0) target = $region17
    $region16: #{tpu_custom_call.1} parent=1 // pred_region
      _
    $region17: #{tpu_custom_call.1} parent=1 // pred_fallthru
      _
    // Predicated region
    $region18: #{tpu_custom_call.1} parent=1 // pred_check
      _
    $region19: #{tpu_custom_call.1} parent=1 // pred_check_branch
      %26 = sbr.rel (0) target = $region21
    $region20: #{tpu_custom_call.1} parent=1 // pred_region
      _
    $region21: #{tpu_custom_call.1} parent=1 // pred_fallthru
      _
    // Predicated region
    $region22: #{tpu_custom_call.1} parent=1 // pred_check
      _
    $region23: #{tpu_custom_call.1} parent=1 // pred_check_branch
      %28 = sbr.rel (0) target = $region25
    $region24: #{tpu_custom_call.1} parent=1 // pred_region
      _
    $region25: #{tpu_custom_call.1} parent=1 // pred_fallthru
      _
    // Predicated region
    $region26: #{tpu_custom_call.1} parent=1 // pred_check
      _
    $region27: #{tpu_custom_call.1} parent=1 // pred_check_branch
      %30 = sbr.rel (0) target = $region29
    $region28: #{tpu_custom_call.1} parent=1 // pred_region
      _
    $region29: #{tpu_custom_call.1} parent=1 // pred_fallthru
      _
    // Predicated region
    $region30: #{tpu_custom_call.1} parent=1 // pred_check
      _
    $region31: #{tpu_custom_call.1} parent=1 // pred_check_branch
      %32 = sbr.rel (0) target = $region33
    $region32: #{tpu_custom_call.1} parent=1 // pred_region
      _
    $region33: #{tpu_custom_call.1} parent=1 // pred_fallthru
      _
    // Predicated region
    $region34: #{tpu_custom_call.1} parent=1 // pred_check
      _
    $region35: #{tpu_custom_call.1} parent=1 // pred_check_branch
      %34 = sbr.rel (0) target = $region37
    $region36: #{tpu_custom_call.1} parent=1 // pred_region
      _
    $region37: #{tpu_custom_call.1} parent=1 // pred_fallthru
      _
    // Predicated region
    $region38: #{tpu_custom_call.1} parent=1 // pred_check
      _
    $region39: #{tpu_custom_call.1} parent=1 // pred_check_branch
      %36 = sbr.rel (0) target = $region41
    $region40: #{tpu_custom_call.1} parent=1 // pred_region
      _
    $region41: #{tpu_custom_call.1} parent=1 // pred_fallthru
      _
    // Predicated region
    $region42: #{tpu_custom_call.1} parent=1 // pred_check
      _
    $region43: #{tpu_custom_call.1} parent=1 // pred_check_branch
      %38 = sbr.rel (0) target = $region45
    $region44: #{tpu_custom_call.1} parent=1 // pred_region
      _
    $region45: #{tpu_custom_call.1} parent=1 // pred_fallthru
      _
    %v40 = vld [vmem:[%s0] sm:$0xff]
    %v41 = vpack.c.bf16 %v40, %v40
    %v42 = vld [vmem:[%s1] sm:$0x3]
    %v43 = vld [vmem:[%s2] sm:$0x1]
    %v45 = vperm.slane %v43, 0
    %vm47 = vcmask 31744
    %v49 = vsel %vm47, %v41, 0
    %vm51 = vcmask 1041408
    %v53 = vsel %vm51, %v42, 0
    %55 = vmatpush.bf16.msra.mxu0 0
    %56 = vmatpush.bf16.msra.mxu0 0
    %57 = vmatpush.bf16.msra.mxu0 0
    %58 = vmatpush.bf16.msra.mxu0 0
    %59 = vmatpush.bf16.msra.mxu0 0
    %60 = vmatpush.bf16.msra.mxu0 0
    %61 = vmatpush.bf16.msra.mxu0 0
    %62 = vmatpush.bf16.msra.mxu0 %v53
    %63 = vmatmul.bf16.gmra.mxu0 %v49
    %v64 = vpop.f32.mrf.mxu0
    %v65 = vadd.f32 %v45, %v64
    %v66 = vpop.f32.mrf.mxu0
    %67 = vdwg.mxu0
    %v68 = vtanh.pop %v65
    %v69 = vpack.c.bf16 %v68, %v68
    %v70 = vld [vmem:[%s3] sm:$0xf]
    %v71 = vld [vmem:[%s3 + $0x4] sm:$0xf]
    %v72 = vld [vmem:[%s3 + $0x8] sm:$0xf]
    %v73 = vld [vmem:[%s3 + $0xc] sm:$0xf]
    %v74 = vld [vmem:[%s4] sm:$0x1]
    %v76 = vperm.slane %v74, 0
    %v82 = vunpack.c.l.b16 %v70
    %v83 = vunpack.c.l.b16 %v71
    %v84 = vunpack.c.l.b16 %v72
    %v85 = vunpack.c.l.b16 %v73
    %v86 = vpack.c.b16 %v83, %v82
    %v87 = vpack.c.b16 %v85, %v84
    %vm90 = vcmask 261120
    %v92 = vsel %vm90, %v69, 0
    %94 = vmatpush.bf16.msra.mxu0 0
    %95 = vmatpush.bf16.msra.mxu0 0
    %96 = vmatpush.bf16.msra.mxu0 0
    %97 = vmatpush.bf16.msra.mxu0 0
    %98 = vmatpush.bf16.msra.mxu0 0
    %99 = vmatpush.bf16.msra.mxu0 0
    %100 = vmatpush.bf16.msra.mxu0 %v87
    %101 = vmatpush.bf16.msra.mxu0 %v86
    %102 = vmatmul.bf16.gmra.mxu0 %v92
    %v103 = vpop.f32.mrf.mxu0
    %v104 = vadd.f32 %v76, %v103
    %v105 = vpop.f32.mrf.mxu0
    %106 = vdwg.mxu0
    %v107 = vtanh.pop %v104
    %v108 = vpack.c.bf16 %v107, %v107
    %v109 = vld [vmem:[%s5] sm:$0xf]
    %v110 = vld [vmem:[%s5 + $0x4] sm:$0xf]
    %v111 = vld [vmem:[%s5 + $0x8] sm:$0xf]
    %v112 = vld [vmem:[%s5 + $0xc] sm:$0xf]
    %v113 = vld [vmem:[%s5 + $0x10] sm:$0xf]
    %v114 = vld [vmem:[%s5 + $0x14] sm:$0xf]
    %v115 = vld [vmem:[%s5 + $0x18] sm:$0xf]
    %v116 = vld [vmem:[%s5 + $0x1c] sm:$0xf]
    %v117 = vld [vmem:[%s6] sm:$0x1]
    %v119 = vperm.slane %v117, 0
    %v129 = vunpack.c.l.b16 %v109
    %v130 = vunpack.c.l.b16 %v110
    %v131 = vunpack.c.l.b16 %v111
    %v132 = vunpack.c.l.b16 %v112
    %v133 = vunpack.c.l.b16 %v113
    %v134 = vunpack.c.l.b16 %v114
    %v135 = vunpack.c.l.b16 %v115
    %v136 = vunpack.c.l.b16 %v116
    %v137 = vpack.c.b16 %v130, %v129
    %v138 = vpack.c.b16 %v132, %v131
    %v139 = vpack.c.b16 %v134, %v133
    %v140 = vpack.c.b16 %v136, %v135
    %vm145 = vcmask 523264
    %v147 = vsel %vm145, %v108, 0
    %149 = vmatpush.bf16.msra.mxu0 0
    %150 = vmatpush.bf16.msra.mxu0 0
    %151 = vmatpush.bf16.msra.mxu0 0
    %152 = vmatpush.bf16.msra.mxu0 0
    %153 = vmatpush.bf16.msra.mxu0 %v140
    %154 = vmatpush.bf16.msra.mxu0 %v139
    %155 = vmatpush.bf16.msra.mxu0 %v138
    %156 = vmatpush.bf16.msra.mxu0 %v137
    %157 = vmatmul.bf16.gmra.mxu0 %v147
    %v158 = vpop.f32.mrf.mxu0
    %v159 = vadd.f32 %v119, %v158
    %v160 = vpop.f32.mrf.mxu0
    %161 = vdwg.mxu0
    %v162 = vtanh.pop %v159
    %v163 = vpack.c.bf16 %v162, %v162
    %v164 = vld [vmem:[%s7] sm:$0xf]
    %v165 = vld [vmem:[%s7 + $0x4] sm:$0xf]
    %v166 = vld [vmem:[%s7 + $0x8] sm:$0xf]
    %v167 = vld [vmem:[%s7 + $0xc] sm:$0xf]
    %v168 = vld [vmem:[%s7 + $0x10] sm:$0xf]
    %v169 = vld [vmem:[%s7 + $0x14] sm:$0xf]
    %v170 = vld [vmem:[%s7 + $0x18] sm:$0xf]
    %v171 = vld [vmem:[%s7 + $0x1c] sm:$0xf]
    %v172 = vld [vmem:[%s7 + $0x20] sm:$0xf]
    %v173 = vld [vmem:[%s7 + $0x24] sm:$0xf]
    %v174 = vld [vmem:[%s7 + $0x28] sm:$0xf]
    %v175 = vld [vmem:[%s7 + $0x2c] sm:$0xf]
    %v176 = vld [vmem:[%s7 + $0x30] sm:$0xf]
    %v177 = vld [vmem:[%s7 + $0x34] sm:$0xf]
    %v178 = vld [vmem:[%s7 + $0x38] sm:$0xf]
    %v179 = vld [vmem:[%s7 + $0x3c] sm:$0xf]
    %v180 = vld [vmem:[%s8] sm:$0x1]
    %v182 = vperm.slane %v180, 0
    %v200 = vunpack.c.l.b16 %v164
    %v201 = vunpack.c.l.b16 %v165
    %v202 = vunpack.c.l.b16 %v166
    %v203 = vunpack.c.l.b16 %v167
    %v204 = vunpack.c.l.b16 %v168
    %v205 = vunpack.c.l.b16 %v169
    %v206 = vunpack.c.l.b16 %v170
    %v207 = vunpack.c.l.b16 %v171
    %v208 = vunpack.c.l.b16 %v172
    %v209 = vunpack.c.l.b16 %v173
    %v210 = vunpack.c.l.b16 %v174
    %v211 = vunpack.c.l.b16 %v175
    %v212 = vunpack.c.l.b16 %v176
    %v213 = vunpack.c.l.b16 %v177
    %v214 = vunpack.c.l.b16 %v178
    %v215 = vunpack.c.l.b16 %v179
    %v216 = vpack.c.b16 %v201, %v200
    %v217 = vpack.c.b16 %v203, %v202
    %v218 = vpack.c.b16 %v205, %v204
    %v219 = vpack.c.b16 %v207, %v206
    %v220 = vpack.c.b16 %v209, %v208
    %v221 = vpack.c.b16 %v211, %v210
    %v222 = vpack.c.b16 %v213, %v212
    %v223 = vpack.c.b16 %v215, %v214
    %232 = vmatpush.bf16.msra.mxu0 %v223
    %233 = vmatpush.bf16.msra.mxu0 %v222
    %234 = vmatpush.bf16.msra.mxu0 %v221
    %235 = vmatpush.bf16.msra.mxu0 %v220
    %236 = vmatpush.bf16.msra.mxu0 %v219
    %237 = vmatpush.bf16.msra.mxu0 %v218
    %238 = vmatpush.bf16.msra.mxu0 %v217
    %239 = vmatpush.bf16.msra.mxu0 %v216
    %240 = vmatmul.bf16.gmra.mxu0 %v163
    %v241 = vpop.f32.mrf.mxu0
    %v242 = vadd.f32 %v182, %v241
    %v243 = vpop.f32.mrf.mxu0
    %244 = vdwg.mxu0
    %v245 = vtanh.pop %v242
    %v246 = vpack.c.bf16 %v245, %v245
    %v247 = vld [vmem:[%s9] sm:$0xf]
    %v248 = vld [vmem:[%s9 + $0x4] sm:$0xf]
    %v249 = vld [vmem:[%s9 + $0x8] sm:$0xf]
    %v250 = vld [vmem:[%s9 + $0xc] sm:$0xf]
    %v251 = vld [vmem:[%s9 + $0x10] sm:$0xf]
    %v252 = vld [vmem:[%s9 + $0x14] sm:$0xf]
    %v253 = vld [vmem:[%s9 + $0x18] sm:$0xf]
    %v254 = vld [vmem:[%s9 + $0x1c] sm:$0xf]
    %v255 = vld [vmem:[%s10] sm:$0x1]
    %v257 = vperm.slane %v255, 0
    %v267 = vunpack.c.l.b16 %v247
    %v268 = vunpack.c.l.b16 %v248
    %v269 = vunpack.c.l.b16 %v249
    %v270 = vunpack.c.l.b16 %v250
    %v271 = vunpack.c.l.b16 %v251
    %v272 = vunpack.c.l.b16 %v252
    %v273 = vunpack.c.l.b16 %v253
    %v274 = vunpack.c.l.b16 %v254
    %v275 = vpack.c.b16 %v268, %v267
    %v276 = vpack.c.b16 %v270, %v269
    %v277 = vpack.c.b16 %v272, %v271
    %v278 = vpack.c.b16 %v274, %v273
    %v284 = vsel %vm145, %v246, 0
    %286 = vmatpush.bf16.msra.mxu0 0
    %287 = vmatpush.bf16.msra.mxu0 0
    %288 = vmatpush.bf16.msra.mxu0 0
    %289 = vmatpush.bf16.msra.mxu0 0
    %290 = vmatpush.bf16.msra.mxu0 %v278
    %291 = vmatpush.bf16.msra.mxu0 %v277
    %292 = vmatpush.bf16.msra.mxu0 %v276
    %293 = vmatpush.bf16.msra.mxu0 %v275
    %294 = vmatmul.bf16.gmra.mxu0 %v284
    %v295 = vpop.f32.mrf.mxu0
    %v296 = vadd.f32 %v257, %v295
    %v297 = vpop.f32.mrf.mxu0
    %298 = vdwg.mxu0
    %v299 = vlaneseq
    %v300 = vand.u32 %v299, 127
    %vm301 = vcmp.lt.s32.totalorder %v300, 5
    %vm302 = vcmp.ge.s32.totalorder %v300, 5
    %vm303 = vcmp.lt.s32.totalorder %v300, 10
    %vm304 = vmand %vm302, %vm303
    %vm305 = vcmp.ge.s32.totalorder %v300, 10
    %vm306 = vcmp.lt.s32.totalorder %v300, 15
    %vm307 = vmand %vm305, %vm306
    %v308 = vsel %vm301, 1, 0
    %vm309 = vcmp.eq.s32.totalorder %v308, 1
    %v310 = vsel %vm309, %v296, -inf
    %311 = vmax.xlane.f32.xlu0 %v310
    %v312 = vpop.xlane.xlu0 %311
    %v313 = vsub.f32 %v296, %v312
    %v314 = vsel %vm307, 1, 0
    %vm315 = vcmp.eq.s32.totalorder %v314, 1
    %v316 = vsel %vm315, %v296, 0.0
    %v317 = vsel %vm309, %v313, %v316
    %v318 = vmul.f32 %v317, 1.442695
    %v319 = vpow.pop %v318
    %v320 = vsel %vm309, %v319, 0.0
    %321 = vadd.xlane.f32.xlu0 %v320
    %v322 = vpop.xlane.xlu0 %321
    %v323 = vrcp.pop %v322
    %v324 = vmul.f32 %v322, %v323
    %v325 = vsub.f32 2.0, %v324
    %v326 = vmul.f32 %v323, %v325
    %v327 = vmul.f32 %v319, %v326
    %v328 = vsel %vm304, 1, 0
    %vm329 = vcmp.eq.s32.totalorder %v328, 1
    %v330 = vsel %vm329, %v296, %v319
    %v331 = vsel %vm309, %v327, %v330
    %332 = vst [vmem:[#allocation2] sm:$0xff] %v331
    // Predicated region
    $region46: #{tpu_custom_call.1} parent=1 // pred_check
      _
    $region47: #{tpu_custom_call.1} parent=1 // pred_check_branch
      %334 = sbr.rel (0) target = $region49
    $region48: #{tpu_custom_call.1} parent=1 // pred_region
      %336 = vsyncadd [#allocation3], 0
      %s338 = sshll.u32 [#allocation2], 4
      %s339 = int_to_ptr.vmem [resolvable:$true] %s338
      %s340 = sshll.u32 %s11, 4
      %s341 = int_to_ptr.hbm [resolvable:$true] %s340
      %343 = dma.vmem_to_hbm [thread:$0]  %s339, 128, %s341, [#allocation3]
    $region49: #{tpu_custom_call.1} parent=1 // pred_fallthru
      _
    // Predicated region
    $region50: #{tpu_custom_call.1} parent=1 // pred_check
      _
    $region51: #{tpu_custom_call.1} parent=1 // pred_check_branch
      %345 = sbr.rel (0) target = $region53
    $region52: #{tpu_custom_call.1} parent=1 // pred_region
      %347 = dma.done [#allocation3], 128
    $region53: #{tpu_custom_call.1} parent=1 // pred_fallthru
      _
    %348 = vsyncpa [#allocation3], 1

</llo_original>
